<compile_context>
chip_gen: v6e
topology: v6e:2x2x1
jax: 0.10.0
libtpu: 0.0.40
codegen_flags: <defaults>
</compile_context>

<pallas_src>
import functools

import numpy as np
import jax
import jax.numpy as jnp
from jax import lax
from jax.experimental import pallas as pl
from jax.experimental.pallas import tpu as pltpu


def _round_up(x, m):
    return (x + m - 1) // m * m


# ---------------------------------------------------------------------------
# Stage 1: cosine weighting + ramp filtering (conv2d with a (1,1,F,1) kernel,
# padding='same', i.e. cross-correlation along N only).
# ---------------------------------------------------------------------------
def _filter_kernel(proj_ref, cosw_ref, out_ref, *, taps):
    """proj_ref: (BC, N, K) f32   projections (N on sublanes, K on lanes)
       cosw_ref: (1, N, 1)  f32   cosWeight, broadcast in-kernel
       out_ref:  (BC, N, K) bf16  weighted + ramp-filtered projections
       taps: static Python floats (length F, odd)."""
    pw = proj_ref[...] * cosw_ref[...]                           # broadcast (1,N,1)
    f = len(taps)
    if f == 1:
        # PyTorch skips the conv entirely when F == 1 (no tap applied).
        out_ref[...] = pw.astype(out_ref.dtype)
        return
    pad = (f - 1) // 2
    bc, n, k = pw.shape
    zpad = jnp.zeros((bc, pad, k), dtype=pw.dtype)
    padded = jnp.concatenate([zpad, pw, zpad], axis=1)           # (BC, N+2*pad, K)
    acc = taps[0] * padded[:, 0:n, :]
    for t in range(1, f):                                        # F is tiny/static
        acc = acc + taps[t] * padded[:, t:t + n, :]
    out_ref[...] = acc.astype(out_ref.dtype)


def _filter_projections(proj_data, cos_weight, taps, out_dtype):
    """Returns weighted + filtered projections, shape (B*C, N, K), out_dtype."""
    bn, c, n, k = proj_data.shape
    bc = bn * c
    proj3 = proj_data.reshape(bc, n, k).astype(jnp.float32)
    cosw = cos_weight.astype(jnp.float32).reshape(1, n, 1)

    kernel = functools.partial(_filter_kernel, taps=taps)
    return pl.pallas_call(
        kernel,
        out_shape=jax.ShapeDtypeStruct((bc, n, k), out_dtype),
        in_specs=[pl.BlockSpec(memory_space=pltpu.MemorySpace.VMEM),
                  pl.BlockSpec(memory_space=pltpu.MemorySpace.VMEM)],
        out_specs=pl.BlockSpec(memory_space=pltpu.MemorySpace.VMEM),
    )(proj3, cosw)


# ---------------------------------------------------------------------------
# Stage 2: tiled, pipelined, block-sparse backprojection   out = proj @ B^T
# ---------------------------------------------------------------------------
def _backproject_kernel(blk_ref, cnt_ref, proj_ref, b_ref, out_ref,
                        *, tk, max_blocks):
    """blk_ref:  (npt*max_blocks,) i32  SMEM: NK-block index per (P tile, step)
       cnt_ref:  (npt,)            i32  SMEM: # of non-empty NK blocks per P tile
       proj_ref: (BC, NK_pad)      bf16 resident filtered projections
       b_ref:    (tp, tk)          bf16 B tile (natural layout, un-transposed)
       out_ref:  (BC, tp)          f32  resident output / accumulator tile."""
    j = pl.program_id(0)
    l = pl.program_id(1)

    @pl.when(l == 0)
    def _():
        out_ref[...] = jnp.zeros_like(out_ref)

    @pl.when(l < cnt_ref[j])
    def _():
        nk_blk = blk_ref[j * max_blocks + l]
        start = pl.multiple_of(nk_blk * tk, tk)
        chunk = proj_ref[:, pl.ds(start, tk)]                    # (BC, tk) bf16
        out_ref[...] += lax.dot_general(
            chunk, b_ref[...],
            dimension_numbers=(((1,), (1,)), ((), ())),          # A @ B^T, no transpose pass
            preferred_element_type=jnp.float32)


def prepare_fbp(b_dense, cos_weight, flt_ramp, im_sz=None, *,
                tk_max=2048, tp_max=2048, compute_dtype=jnp.bfloat16):
    """One-time preprocessing of the fixed geometry (B, cosWeight, fltRamp)."""
    b_dense = jnp.asarray(b_dense)
    p, nk = b_dense.shape
    if im_sz is None:
        sz = int(round(p ** 0.5))
        im_sz = (sz, sz)

    # Ramp taps are fixed module constants -> bake them in as static floats.
    taps = tuple(float(v) for v in
                 np.asarray(jax.device_get(flt_ramp), dtype=np.float32))
    assert len(taps) == 1 or len(taps) % 2 == 1, "odd filter length for 'same'"

    # --- tile selection ------------------------------------------------------
    tk = min(tk_max, _round_up(nk, 128))
    nk_pad = _round_up(nk, tk)

    p128 = _round_up(p, 128)
    tp = min(tp_max, p128)
    if p128 // tp < 2 and p128 >= 256:
        # Megacore occupancy guard (v7x has 2 TCs): keep >= 2 P tiles.
        tp = _round_up(-(-p128 // 2), 128)
    p_pad = _round_up(p, tp)

    npt = p_pad // tp
    nkt = nk_pad // tk

    # --- one-time B preprocessing: pad + cast, natural (P, NK) layout --------
    b_prep = jnp.pad(b_dense.astype(compute_dtype),
                     ((0, p_pad - p), (0, nk_pad - nk)))

    # Block occupancy: skip all-zero (tp, tk) B blocks entirely.
    occ = np.asarray(jax.device_get(
        jnp.any(b_prep.reshape(npt, tp, nkt, tk) != 0, axis=(1, 3))))  # (npt, nkt)
    counts = occ.sum(axis=1).astype(np.int32)                          # (npt,)
    max_blocks = max(int(counts.max()), 1)
    blk_idx = np.zeros((npt, max_blocks), dtype=np.int32)
    for jrow in range(npt):
        nz = np.nonzero(occ[jrow])[0]
        blk_idx[jrow, :len(nz)] = nz
        # Repeat the last valid index for padded steps -> same block index
        # between consecutive steps => no extra DMA is issued.
        blk_idx[jrow, len(nz):] = nz[-1] if len(nz) else 0

    return dict(
        b_prep=b_prep,
        blk_idx=jnp.asarray(blk_idx.reshape(-1), dtype=jnp.int32),
        counts=jnp.asarray(counts, dtype=jnp.int32),
        counts_np=counts,
        cos_weight=jnp.asarray(cos_weight, dtype=jnp.float32),
        taps=taps, im_sz=im_sz, p=p, nk=nk,
        tk=tk, tp=tp, nk_pad=nk_pad, p_pad=p_pad,
        npt=npt, max_blocks=max_blocks,
        compute_dtype=compute_dtype,
    )


def fbp_forward(proj_data, state):
    bn, c, n, k = proj_data.shape
    bc = bn * c
    nk = n * k
    assert nk == state["nk"], "projection size inconsistent with B"

    tk, tp = state["tk"], state["tp"]
    nk_pad, p_pad = state["nk_pad"], state["p_pad"]
    npt, max_blocks = state["npt"], state["max_blocks"]
    cdt = state["compute_dtype"]
    itemsize = jnp.dtype(cdt).itemsize

    # --- Stage 1: weighting + ramp filtering, emitted directly in bf16 -------
    pf = _filter_projections(proj_data, state["cos_weight"], state["taps"], cdt)
    proj_in = jnp.pad(pf.reshape(bc, nk), ((0, 0), (0, nk_pad - nk)))  # (bc, nk_pad)

    # --- Stage 2: block-sparse tiled backprojection ---------------------------
    grid = (npt, max_blocks)
    kernel = functools.partial(_backproject_kernel, tk=tk, max_blocks=max_blocks)

    # VMEM budget: B double-buffer + resident proj (budget 2x) + out double-buffer.
    vmem_bytes = (2 * tp * tk * itemsize
                  + 2 * bc * nk_pad * itemsize
                  + 2 * bc * tp * 4
                  + (4 << 20))
    vmem_limit = int(min(max(vmem_bytes, 32 << 20), 64 << 20))   # fits v7x's 64 MiB

    nnz_blocks = int(state["counts_np"].sum())
    cost = pl.CostEstimate(
        flops=2 * bc * max(nnz_blocks, 1) * tk * tp,
        transcendentals=0,
        bytes_accessed=int(max(nnz_blocks, 1) * tk * tp * itemsize
                           + bc * nk_pad * itemsize
                           + bc * p_pad * 4))

    out = pl.pallas_call(
        kernel,
        out_shape=jax.ShapeDtypeStruct((bc, p_pad), jnp.float32),
        grid_spec=pltpu.PrefetchScalarGridSpec(
            num_scalar_prefetch=2,
            grid=grid,
            in_specs=[
                # proj: constant block index => fetched once, VMEM resident.
                pl.BlockSpec((bc, nk_pad), lambda j, l, blk, cnt: (0, 0)),
                # B: natural layout, data-dependent NK block via scalar prefetch.
                pl.BlockSpec((tp, tk),
                             lambda j, l, blk, cnt: (j, blk[j * max_blocks + l])),
            ],
            out_specs=pl.BlockSpec((bc, tp), lambda j, l, blk, cnt: (0, j)),
        ),
        compiler_params=pltpu.CompilerParams(
            dimension_semantics=("parallel", "arbitrary"),
            vmem_limit_bytes=vmem_limit),
        cost_estimate=cost,
    )(state["blk_idx"], state["counts"], proj_in, state["b_prep"])

    x2d = out[:, :state["p"]]
    return x2d.reshape(bn, c, -1, state["im_sz"][1])


# ---------------------------------------------------------------------------
# Plain-JAX mirror of the PyTorch forward (f32, for the sanity check).
# ---------------------------------------------------------------------------
def _reference_f32(proj, b_dense, cos_weight, flt_ramp, im_sz):
    bn, c, n, k = proj.shape
    pw = proj * cos_weight.reshape(-1, 1)
    kern = flt_ramp.reshape(1, 1, -1, 1)
    if kern.shape[2] > 1:
        pf = lax.conv_general_dilated(
            pw, kern, window_strides=(1, 1), padding="SAME",
            dimension_numbers=("NCHW", "OIHW", "NCHW"))
    else:
        pf = pw
    p2d = pf.reshape(bn * c, n * k)
    x2d = (b_dense @ p2d.T).T
    return x2d.reshape(bn, c, -1, im_sz[1])


if __name__ == "__main__":
    B, C, N, K = 2, 1, 16, 8          # C must be 1 (PyTorch conv2d weight (1,1,F,1))
    IM = (8, 8)
    P = IM[0] * IM[1]                 # B matrix rows = imSz[0]*imSz[1]

    key = jax.random.PRNGKey(0)
    kp, kb = jax.random.split(key)

    proj = jax.random.uniform(kp, (B, C, N, K), dtype=jnp.float32)
    cos_weight = jnp.cos(jnp.linspace(-0.4, 0.4, N)).astype(jnp.float32)        # (N,)
    flt_ramp = jnp.array([-0.05, -0.25, 1.0, -0.25, -0.05], dtype=jnp.float32)  # (F,)
    bvals = jax.random.uniform(kb, (P, N * K), dtype=jnp.float32)
    b_dense = jnp.where(bvals > 0.75, bvals, 0.0) * 0.1   # deterministic "sparse" B

    state = prepare_fbp(b_dense, cos_weight, flt_ramp, IM)   # one-time geometry prep
    out = fbp_forward(proj, state)
    out = jax.block_until_ready(out)
    assert out.shape == (B, C, IM[0], IM[1])

    ref = _reference_f32(proj, b_dense, cos_weight, flt_ramp, IM)

    # B/proj are streamed in bf16 (deliberate bandwidth optimization, f32
    # accumulation), so compare at bf16-level tolerance.
    if not jnp.allclose(out, ref, rtol=2e-2, atol=2e-2):
        raise AssertionError("Pallas FBP output mismatch vs JAX reference")
    print("KERNEL_OK")
</pallas_src>

<mosaic_0001>
module attributes {stable_mosaic.version = 11 : i64} {
  func.func @_filter_kernel(%arg0: memref<2x16x8xf32, #tpu.memory_space<vmem>>, %arg1: memref<1x16x1xf32, #tpu.memory_space<vmem>>, %arg2: memref<2x16x8xbf16, #tpu.memory_space<vmem>>) attributes {dimension_semantics = [], scalar_prefetch = 0 : i64, scratch_operands = 0 : i64, tpu.core_type = #tpu.core_type<tc>} {
    %c0 = arith.constant 0 : index
    %c0_0 = arith.constant 0 : index
    %c0_1 = arith.constant 0 : index
    %0 = vector.load %arg0[%c0, %c0_0, %c0_1] : memref<2x16x8xf32, #tpu.memory_space<vmem>>, vector<2x16x8xf32>
    %c0_2 = arith.constant 0 : index
    %c0_3 = arith.constant 0 : index
    %c0_4 = arith.constant 0 : index
    %1 = vector.load %arg1[%c0_2, %c0_3, %c0_4] : memref<1x16x1xf32, #tpu.memory_space<vmem>>, vector<1x16x1xf32>
    %2 = vector.broadcast %1 : vector<1x16x1xf32> to vector<2x16x8xf32>
    %3 = arith.mulf %0, %2 : vector<2x16x8xf32>
    %cst = arith.constant 0.000000e+00 : f32
    %4 = vector.broadcast %cst : f32 to vector<2x2x8xf32>
    %5 = tpu.concatenate %4, %3, %4 in 1 : vector<2x2x8xf32>, vector<2x16x8xf32>, vector<2x2x8xf32> -> vector<2x20x8xf32>
    %6 = vector.extract_strided_slice %5 {offsets = [0, 0, 0], sizes = [2, 16, 8], strides = [1, 1, 1]} : vector<2x20x8xf32> to vector<2x16x8xf32>
    %cst_5 = arith.constant -5.000000e-02 : f32
    %7 = vector.broadcast %cst_5 : f32 to vector<2x16x8xf32>
    %8 = arith.mulf %7, %6 : vector<2x16x8xf32>
    %9 = vector.extract_strided_slice %5 {offsets = [0, 1, 0], sizes = [2, 16, 8], strides = [1, 1, 1]} : vector<2x20x8xf32> to vector<2x16x8xf32>
    %cst_6 = arith.constant -2.500000e-01 : f32
    %10 = vector.broadcast %cst_6 : f32 to vector<2x16x8xf32>
    %11 = arith.mulf %10, %9 : vector<2x16x8xf32>
    %12 = arith.addf %8, %11 : vector<2x16x8xf32>
    %13 = vector.extract_strided_slice %5 {offsets = [0, 2, 0], sizes = [2, 16, 8], strides = [1, 1, 1]} : vector<2x20x8xf32> to vector<2x16x8xf32>
    %cst_7 = arith.constant 1.000000e+00 : f32
    %14 = vector.broadcast %cst_7 : f32 to vector<2x16x8xf32>
    %15 = arith.mulf %14, %13 : vector<2x16x8xf32>
    %16 = arith.addf %12, %15 : vector<2x16x8xf32>
    %17 = vector.extract_strided_slice %5 {offsets = [0, 3, 0], sizes = [2, 16, 8], strides = [1, 1, 1]} : vector<2x20x8xf32> to vector<2x16x8xf32>
    %cst_8 = arith.constant -2.500000e-01 : f32
    %18 = vector.broadcast %cst_8 : f32 to vector<2x16x8xf32>
    %19 = arith.mulf %18, %17 : vector<2x16x8xf32>
    %20 = arith.addf %16, %19 : vector<2x16x8xf32>
    %21 = vector.extract_strided_slice %5 {offsets = [0, 4, 0], sizes = [2, 16, 8], strides = [1, 1, 1]} : vector<2x20x8xf32> to vector<2x16x8xf32>
    %cst_9 = arith.constant -5.000000e-02 : f32
    %22 = vector.broadcast %cst_9 : f32 to vector<2x16x8xf32>
    %23 = arith.mulf %22, %21 : vector<2x16x8xf32>
    %24 = arith.addf %20, %23 : vector<2x16x8xf32>
    %25 = arith.truncf %24 : vector<2x16x8xf32> to vector<2x16x8xbf16>
    %c0_10 = arith.constant 0 : index
    %c0_11 = arith.constant 0 : index
    %c0_12 = arith.constant 0 : index
    %26 = vector.load %arg2[%c0_10, %c0_11, %c0_12] : memref<2x16x8xbf16, #tpu.memory_space<vmem>>, vector<2x16x8xbf16>
    tpu.vector_store %arg2[%c0_10, %c0_11, %c0_12], %25 {strides = array<i32>} : memref<2x16x8xbf16, #tpu.memory_space<vmem>>, vector<2x16x8xbf16>,
    return
  }
}

</mosaic_0001>

<llo_original>
// kernel: tpu_custom_call.1
$region0: #{tpu_custom_call.1}
  #allocation0 [shape = 'u32[]', space=smem, size = 0x4, offset = 0x4, fixed_abs, tag = 'smem constant byte address 0x4 - core index']
  #allocation1 [shape = 'u32[144,128]{1,0:T(1,128)}', space=vmem, size = 0x12000, scoped, tag = 'internal scratch']
  %s0 = inlined_call_operand.vmem [shape: f32[2,16,8], index: 0, kind: input, shape index: {}]
  %s1 = inlined_call_operand.vmem [shape: f32[1,16,1], index: 1, kind: input, shape index: {}]
  %s2 = inlined_call_operand.vmem [shape: bf16[2,16,8], index: 2, kind: output, shape index: {}]
  %s3 = sld [smem:[#allocation0]]
  $region18: #{tpu_custom_call.1} parent=0
    _
  %s5 = ssub.s32 1, %s3
  %s6 = scalar_select 0, %s5, %s3
  // Predicated region
  $region2: #{tpu_custom_call.1} parent=0 // pred_check
    _
  $region3: #{tpu_custom_call.1} parent=0 // pred_check_branch
    %8 = sbr.rel (0) target = $region5
  $region4: #{tpu_custom_call.1} parent=0 // pred_region
    _
  $region5: #{tpu_custom_call.1} parent=0 // pred_fallthru
    _
  // Predicated region
  $region6: #{tpu_custom_call.1} parent=0 // pred_check
    _
  $region7: #{tpu_custom_call.1} parent=0 // pred_check_branch
    %10 = sbr.rel (0) target = $region9
  $region8: #{tpu_custom_call.1} parent=0 // pred_region
    _
  $region9: #{tpu_custom_call.1} parent=0 // pred_fallthru
    _
  %v11 = vld [vmem:[%s0] sm:$0xff]
  %v12 = vld [vmem:[%s0 + $0x8] sm:$0xff]
  %v13 = vld [vmem:[%s0 + $0x10] sm:$0xff]
  %v14 = vld [vmem:[%s0 + $0x18] sm:$0xff]
  %v15 = vld [vmem:[%s1] sm:$0xff]
  %v16 = vld [vmem:[%s1 + $0x8] sm:$0xff]
  %18 = vset.pattern.permute.xlu0 0
  %19 = vperm.xlu0 %18, %v15
  %v20 = vpop.permute.xlu0 %19
  %23 = vset.pattern.permute.xlu0 0
  %24 = vperm.xlu0 %23, %v16
  %v25 = vpop.permute.xlu0 %24
  %v27 = vmul.f32 %v11, %v20
  %v28 = vmul.f32 %v12, %v25
  %v29 = vmul.f32 %v13, %v20
  %v30 = vmul.f32 %v14, %v25
  %vm35 = vcmask 1041408
  %v36 = vrot.slane %v27, 6
  %v37 = vrot.slane %v28, 6
  %v38 = vsel %vm35, %v36, %v37
  %v39 = vrot.slane %v29, 6
  %v40 = vrot.slane %v30, 6
  %v41 = vsel %vm35, %v39, %v40
  %v48 = vsel %vm35, 0.0, %v36
  %v49 = vsel %vm35, 0.0, %v39
  %v50 = vsel %vm35, %v37, 0.0
  %v51 = vsel %vm35, %v40, 0.0
  %v52 = vmul.f32 %v48, -0.05
  %v53 = vmul.f32 %v38, -0.05
  %v54 = vmul.f32 %v49, -0.05
  %v55 = vmul.f32 %v41, -0.05
  %v56 = vmul.f32 %v48, -0.25
  %v57 = vmul.f32 %v38, -0.25
  %v58 = vmul.f32 %v50, -0.25
  %v59 = vmul.f32 %v49, -0.25
  %v60 = vmul.f32 %v41, -0.25
  %v61 = vmul.f32 %v51, -0.25
  %vm68 = vcmask 1046528
  %v69 = vrot.slane %v56, 1
  %v70 = vrot.slane %v57, 1
  %v71 = vsel %vm68, %v69, %v70
  %v72 = vrot.slane %v58, 1
  %v73 = vsel %vm68, %v70, %v72
  %v74 = vrot.slane %v59, 1
  %v75 = vrot.slane %v60, 1
  %v76 = vsel %vm68, %v74, %v75
  %v77 = vrot.slane %v61, 1
  %v78 = vsel %vm68, %v75, %v77
  %v83 = vadd.f32 %v52, %v71
  %v84 = vadd.f32 %v53, %v73
  %v85 = vadd.f32 %v54, %v76
  %v86 = vadd.f32 %v55, %v78
  %vm91 = vcmask 1045504
  %v92 = vrot.slane %v48, 2
  %v93 = vrot.slane %v38, 2
  %v94 = vsel %vm91, %v92, %v93
  %v95 = vrot.slane %v50, 2
  %v96 = vsel %vm91, %v93, %v95
  %v97 = vrot.slane %v49, 2
  %v98 = vrot.slane %v41, 2
  %v99 = vsel %vm91, %v97, %v98
  %v100 = vrot.slane %v51, 2
  %v101 = vsel %vm91, %v98, %v100
  %v106 = vadd.f32 %v83, %v94
  %v107 = vadd.f32 %v84, %v96
  %v108 = vadd.f32 %v85, %v99
  %v109 = vadd.f32 %v86, %v101
  %vm110 = vcmask 1044480
  %v111 = vrot.slane %v56, 3
  %v112 = vrot.slane %v57, 3
  %v113 = vsel %vm110, %v111, %v112
  %v114 = vrot.slane %v58, 3
  %v115 = vsel %vm110, %v112, %v114
  %v116 = vrot.slane %v59, 3
  %v117 = vrot.slane %v60, 3
  %v118 = vsel %vm110, %v116, %v117
  %v119 = vrot.slane %v61, 3
  %v120 = vsel %vm110, %v117, %v119
  %v125 = vadd.f32 %v106, %v113
  %v126 = vadd.f32 %v107, %v115
  %v127 = vadd.f32 %v108, %v118
  %v128 = vadd.f32 %v109, %v120
  %v129 = vmul.f32 %v50, -0.05
  %v130 = vmul.f32 %v51, -0.05
  %vm137 = vcmask 1043456
  %v138 = vrot.slane %v52, 4
  %v139 = vrot.slane %v53, 4
  %v140 = vsel %vm137, %v138, %v139
  %v141 = vrot.slane %v129, 4
  %v142 = vsel %vm137, %v139, %v141
  %v143 = vrot.slane %v54, 4
  %v144 = vrot.slane %v55, 4
  %v145 = vsel %vm137, %v143, %v144
  %v146 = vrot.slane %v130, 4
  %v147 = vsel %vm137, %v144, %v146
  %v152 = vadd.f32 %v125, %v140
  %v153 = vadd.f32 %v126, %v142
  %v154 = vadd.f32 %v127, %v145
  %v155 = vadd.f32 %v128, %v147
  %v156 = vpack.c.bf16 %v153, %v152
  %v157 = vpack.c.bf16 %v155, %v154
  %v160 = vunpack.c.l.b16 %v156
  %v161 = vunpack.c.h.b16 %v156
  %v162 = vunpack.c.l.b16 %v157
  %v163 = vunpack.c.h.b16 %v157
  %v164 = vpack.c.b16 %v160, %v160
  %v165 = vpack.c.b16 %v161, %v161
  %v166 = vpack.c.b16 %v162, %v162
  %v167 = vpack.c.b16 %v163, %v163
  %vm172 = vcmask 60416
  %173 = vst.msk [vmem:[%s2] sm:$0xf] %vm172, %v164
  %174 = vst.msk [vmem:[%s2 + $0x4] sm:$0xf] %vm172, %v165
  %175 = vst.msk [vmem:[%s2 + $0x8] sm:$0xf] %vm172, %v166
  %176 = vst.msk [vmem:[%s2 + $0xc] sm:$0xf] %vm172, %v167
  // Predicated region
  $region10: #{tpu_custom_call.1} parent=0 // pred_check
    _
  $region11: #{tpu_custom_call.1} parent=0 // pred_check_branch
    %178 = sbr.rel (0) target = $region13
  $region12: #{tpu_custom_call.1} parent=0 // pred_region
    _
  $region13: #{tpu_custom_call.1} parent=0 // pred_fallthru
    _
  // Predicated region
  $region14: #{tpu_custom_call.1} parent=0 // pred_check
    _
  $region15: #{tpu_custom_call.1} parent=0 // pred_check_branch
    %180 = sbr.rel (0) target = $region17
  $region16: #{tpu_custom_call.1} parent=0 // pred_region
    _
  $region17: #{tpu_custom_call.1} parent=0 // pred_fallthru
    _

</llo_original>
